<compile_context>
chip_gen: v6e
topology: v6e:2x2x1
jax: 0.10.0
libtpu: 0.0.40
codegen_flags: <defaults>
</compile_context>

<pallas_src>
import jax
import jax.numpy as jnp
from jax.experimental import pallas as pl
from jax.experimental.pallas import tpu as pltpu


def fused_linear_kernel(xa_ref, wa_ref, o_ref):
    # xa_ref: (M, K+1) in VMEM — x with a trailing 1.0 bias-carrier column
    # wa_ref: (K+1, N) in VMEM — [W^T ; bias + other], built once at param prep
    # o_ref:  (M, N)   in VMEM
    # Single clean MXU issue; bias+other is absorbed by the matmul, so there is
    # no third input DMA and no epilogue add.
    o_ref[...] = jnp.dot(
        xa_ref[...], wa_ref[...], preferred_element_type=jnp.float32
    ).astype(o_ref.dtype)


def prepare_params(w, b, other):
    """One-time parameter prep (hoist/cache this; do NOT call per forward).

    w: (N, K) as stored by nn.Linear, b: (N,), other: (1, N).
    Returns w_aug: (K+1, N) f32 = [w.T ; b + other]: weight pre-transposed to
    the lane-dense (K, N) RHS layout with the fused bias row appended.
    """
    n = w.shape[0]
    w_t = jnp.asarray(w, jnp.float32).T                         # (K, N)
    bias_plus_other = (jnp.asarray(b, jnp.float32).reshape(1, n)
                       + jnp.asarray(other, jnp.float32))       # (1, N)
    return jnp.concatenate([w_t, bias_plus_other], axis=0)      # (K+1, N)


@jax.jit
def model_forward(x, w_aug):
    """x: (M, 10), w_aug: (11, 20) -> (M, 20) == x @ W^T + b + other.

    At M == 1 a single VMEM-resident block is fastest (launch-latency bound).
    If M is scaled up (>= a few hundred rows): switch to a 1-D grid over M
    (TM ~ 256-512, multiple of 8), keep w_aug VMEM-resident via
    index_map -> (0, 0), mark the axis "parallel" (2 TCs on v7x), drop the
    ones-concat in favor of the 3-input (x, w_t, bias) variant so x is not
    re-materialized, and budget VMEM against the 64 MiB v7x limit.
    """
    M, _ = x.shape
    Kp1, N = w_aug.shape

    # Trailing 1.0 column selects the fused bias row of w_aug. At M == 1 this
    # is a trivial op fused by jit; it never round-trips HBM on its own.
    xa = jnp.concatenate(
        [x.astype(jnp.float32), jnp.ones((M, 1), jnp.float32)], axis=1)

    vmem = pl.BlockSpec(memory_space=pltpu.MemorySpace.VMEM)
    return pl.pallas_call(
        fused_linear_kernel,
        out_shape=jax.ShapeDtypeStruct((M, N), jnp.float32),
        in_specs=[vmem, vmem],
        out_specs=vmem,
        cost_estimate=pl.CostEstimate(
            flops=2 * M * Kp1 * N,
            bytes_accessed=(M * Kp1 + Kp1 * N + M * N) * 4,
            transcendentals=0,
        ),
    )(xa, w_aug)


if __name__ == "__main__":
    key = jax.random.PRNGKey(0)
    k_x, k_w, k_b, k_o = jax.random.split(key, 4)

    in_features, out_features = 10, 20
    M = 1  # batch, as in the reference module

    # Deterministic parameter init (PyTorch Linear-style uniform bounds).
    bound = 1.0 / (in_features ** 0.5)
    x = jax.random.normal(k_x, (M, in_features), dtype=jnp.float32)
    w = jax.random.uniform(k_w, (out_features, in_features),
                           minval=-bound, maxval=bound, dtype=jnp.float32)
    b = jax.random.uniform(k_b, (out_features,),
                           minval=-bound, maxval=bound, dtype=jnp.float32)
    other = jax.random.normal(k_o, (1, out_features), dtype=jnp.float32)

    # One-time parameter prep (transpose + bias fusion), outside the hot path.
    w_aug = jax.block_until_ready(prepare_params(w, b, other))

    out = jax.block_until_ready(model_forward(x, w_aug))

    # Sanity check against pure-JAX reference.
    ref = x @ w.T + b + other
    assert out.shape == (M, out_features)
    assert jnp.allclose(out, ref, atol=1e-5, rtol=1e-5)

    print("KERNEL_OK")
</pallas_src>

<mosaic_0001>
module attributes {stable_mosaic.version = 11 : i64} {
  func.func @fused_linear_kernel(%arg0: memref<1x11xf32, #tpu.memory_space<vmem>>, %arg1: memref<11x20xf32, #tpu.memory_space<vmem>>, %arg2: memref<1x20xf32, #tpu.memory_space<vmem>>) attributes {dimension_semantics = [], scalar_prefetch = 0 : i64, scratch_operands = 0 : i64, tpu.core_type = #tpu.core_type<tc>} {
    %c0 = arith.constant 0 : index
    %c0_0 = arith.constant 0 : index
    %0 = vector.load %arg0[%c0, %c0_0] : memref<1x11xf32, #tpu.memory_space<vmem>>, vector<1x11xf32>
    %c0_1 = arith.constant 0 : index
    %c0_2 = arith.constant 0 : index
    %1 = vector.load %arg1[%c0_1, %c0_2] : memref<11x20xf32, #tpu.memory_space<vmem>>, vector<11x20xf32>
    %cst = arith.constant dense<0.000000e+00> : vector<1x20xf32>
    %2 = tpu.matmul %0, %1, %cst {dimension_numbers = #tpu.dot_dimension_numbers<[1], [0], [0], [1], [0, 0, 1, 1], [], []>} : vector<1x11xf32>, vector<11x20xf32>, vector<1x20xf32> -> vector<1x20xf32>
    %c0_3 = arith.constant 0 : index
    %c0_4 = arith.constant 0 : index
    %3 = vector.load %arg2[%c0_3, %c0_4] : memref<1x20xf32, #tpu.memory_space<vmem>>, vector<1x20xf32>
    tpu.vector_store %arg2[%c0_3, %c0_4], %2 {strides = array<i32>} : memref<1x20xf32, #tpu.memory_space<vmem>>, vector<1x20xf32>,
    return
  }
}

</mosaic_0001>

<llo_original>
// kernel: model_forward.1
$region0: #{model_forward.1}
  #allocation0 [shape = 'u32[]', space=smem, size = 0x4, offset = 0x4, fixed_abs, tag = 'smem constant byte address 0x4 - core index']
  #allocation1 [shape = 'u32[144,128]{1,0:T(1,128)}', space=vmem, size = 0x12000, scoped, tag = 'internal scratch']
  %s0 = inlined_call_operand.vmem [shape: f32[1,11], index: 0, kind: input, shape index: {}]
  %s1 = inlined_call_operand.hbm [shape: f32[11,20], index: 1, kind: input, shape index: {}]
  %s2 = inlined_call_operand.hbm [shape: f32[1,20], index: 2, kind: output, shape index: {}]
  %s3 = sld [smem:[#allocation0]]
  $region22: #{model_forward.1} parent=0
    _
  %s5 = ssub.s32 1, %s3
  %s6 = scalar_select 0, %s5, %s3
  $region1: #{model_forward.1} parent=0
    #allocation2 [shape = 'u8[8192]{0}', space=vmem, size = 0x2000, scoped, tag = 'input window, operand 1, single buffered']
    #allocation3 [shape = 's32[1]{0}', space=sflag, size = 0x4, scoped, tag = 'scoped memory for model_forward.1']
    #allocation4 [shape = 's32[1]{0}', space=sflag, size = 0x4, scoped, tag = 'scoped memory for model_forward.1']
    #allocation5 [shape = 'u8[512]{0}', space=vmem, size = 0x400, scoped, tag = 'output window, operand 0, single buffered']
    %7 = vsyncpa [#allocation3], 0
    %8 = vsyncpa [#allocation4], 0
    // Predicated region
    $region2: #{model_forward.1} parent=1 // pred_check
      _
    $region3: #{model_forward.1} parent=1 // pred_check_branch
      %10 = sbr.rel (0) target = $region5
    $region4: #{model_forward.1} parent=1 // pred_region
      _
    $region5: #{model_forward.1} parent=1 // pred_fallthru
      _
    // Predicated region
    $region6: #{model_forward.1} parent=1 // pred_check
      _
    $region7: #{model_forward.1} parent=1 // pred_check_branch
      %12 = sbr.rel (0) target = $region9
    $region8: #{model_forward.1} parent=1 // pred_region
      %s14 = ssub.s32 256, 256
      %15 = vsyncadd [#allocation3], %s14
      %s16 = sshll.u32 [#allocation2], 4
      %s17 = int_to_ptr.vmem [resolvable:$true] %s16
      %22 = dma.hbm_to_vmem [thread:$0]  %s1, 256, %s17, [#allocation3], 128, 128, 8
    $region9: #{model_forward.1} parent=1 // pred_fallthru
      _
    // Predicated region
    $region10: #{model_forward.1} parent=1 // pred_check
      _
    $region11: #{model_forward.1} parent=1 // pred_check_branch
      %24 = sbr.rel (0) target = $region13
    $region12: #{model_forward.1} parent=1 // pred_region
      %25 = dma.done [#allocation3], 256
    $region13: #{model_forward.1} parent=1 // pred_fallthru
      _
    %v26 = vld [vmem:[%s0] sm:$0x1]
    %v27 = vld [vmem:[#allocation2] sm:$0xff]
    %v28 = vld [vmem:[#allocation2 + $0x8] sm:$0x7]
    %vm29 = vcmask 89088
    %v31 = vsel %vm29, %v26, 0
    %vm33 = vcmask 1042432
    %v35 = vsel %vm33, %v28, 0
    %37 = vmatprep.subr.mxu0 0.0
    %38 = vmatpush1.msra.mxu0 0.0
    %39 = vmatprep.subr.mxu0 0.0
    %40 = vmatpush1.msra.mxu0 0.0
    %41 = vmatprep.subr.mxu0 0.0
    %42 = vmatpush1.msra.mxu0 0.0
    %43 = vmatprep.subr.mxu0 0.0
    %44 = vmatpush1.msra.mxu0 0.0
    %45 = vmatprep.subr.mxu0 0.0
    %46 = vmatpush1.msra.mxu0 0.0
    %47 = vmatprep.subr.mxu0 0.0
    %48 = vmatpush1.msra.mxu0 0.0
    %49 = vmatprep.subr.mxu0 0.0
    %50 = vmatpush1.msra.mxu0 0.0
    %51 = vmatprep.subr.mxu0 0.0
    %52 = vmatpush1.msra.mxu0 0.0
    %53 = vmatprep.subr.mxu0 0.0
    %54 = vmatpush1.msra.mxu0 0.0
    %55 = vmatprep.subr.mxu0 0.0
    %56 = vmatpush1.msra.mxu0 0.0
    %57 = vmatprep.subr.mxu0 0.0
    %58 = vmatpush1.msra.mxu0 0.0
    %59 = vmatprep.subr.mxu0 0.0
    %60 = vmatpush1.msra.mxu0 0.0
    %61 = vmatprep.subr.mxu0 0.0
    %62 = vmatpush1.msra.mxu0 0.0
    %63 = vmatprep.subr.mxu0 0.0
    %64 = vmatpush1.msra.mxu0 0.0
    %65 = vmatprep.subr.mxu0 0.0
    %66 = vmatpush1.msra.mxu0 %v35
    %67 = vmatprep.subr.mxu0 0.0
    %68 = vmatpush1.msra.mxu0 %v27
    %69 = vmatprep.subr.mxu0 0.0
    %70 = vmatpush2.msra.mxu0 0.0
    %71 = vmatprep.subr.mxu0 0.0
    %72 = vmatpush2.msra.mxu0 0.0
    %73 = vmatprep.subr.mxu0 0.0
    %74 = vmatpush2.msra.mxu0 0.0
    %75 = vmatprep.subr.mxu0 0.0
    %76 = vmatpush2.msra.mxu0 0.0
    %77 = vmatprep.subr.mxu0 0.0
    %78 = vmatpush2.msra.mxu0 0.0
    %79 = vmatprep.subr.mxu0 0.0
    %80 = vmatpush2.msra.mxu0 0.0
    %81 = vmatprep.subr.mxu0 0.0
    %82 = vmatpush2.msra.mxu0 0.0
    %83 = vmatprep.subr.mxu0 0.0
    %84 = vmatpush2.msra.mxu0 0.0
    %85 = vmatprep.subr.mxu0 0.0
    %86 = vmatpush2.msra.mxu0 0.0
    %87 = vmatprep.subr.mxu0 0.0
    %88 = vmatpush2.msra.mxu0 0.0
    %89 = vmatprep.subr.mxu0 0.0
    %90 = vmatpush2.msra.mxu0 0.0
    %91 = vmatprep.subr.mxu0 0.0
    %92 = vmatpush2.msra.mxu0 0.0
    %93 = vmatprep.subr.mxu0 0.0
    %94 = vmatpush2.msra.mxu0 0.0
    %95 = vmatprep.subr.mxu0 0.0
    %96 = vmatpush2.msra.mxu0 0.0
    %97 = vmatprep.subr.mxu0 0.0
    %98 = vmatpush2.msra.mxu0 0.0
    %99 = vmatprep.subr.mxu0 0.0
    %100 = vmatpush2.msra.mxu0 0.0
    %101 = vmatprep.mubr.f32.mxu0 0.0
    %102 = vmatmul.mubr.f32.gmra.mxu0 %v31
    %v103 = vpop.f32.mrf.mxu0
    %v104 = vadd.f32 0.0, %v103
    %v105 = vpop.f32.mrf.mxu0
    %106 = vdwg.mxu0
    %vm107 = vcmask 155648
    %108 = vst.msk [vmem:[#allocation5] sm:$0x1] %vm107, %v104
    // Predicated region
    $region14: #{model_forward.1} parent=1 // pred_check
      _
    $region15: #{model_forward.1} parent=1 // pred_check_branch
      %110 = sbr.rel (0) target = $region17
    $region16: #{model_forward.1} parent=1 // pred_region
      %s112 = ssub.s32 16, 16
      %113 = vsyncadd [#allocation4], %s112
      %s115 = sshll.u32 [#allocation5], 4
      %s116 = int_to_ptr.vmem [resolvable:$true] %s115
      %118 = dma.vmem_to_hbm [thread:$0]  %s116, 16, %s2, [#allocation4]
    $region17: #{model_forward.1} parent=1 // pred_fallthru
      _
    // Predicated region
    $region18: #{model_forward.1} parent=1 // pred_check
      _
    $region19: #{model_forward.1} parent=1 // pred_check_branch
      %120 = sbr.rel (0) target = $region21
    $region20: #{model_forward.1} parent=1 // pred_region
      %121 = dma.done [#allocation4], 16
    $region21: #{model_forward.1} parent=1 // pred_fallthru
      _
    %122 = vsyncpa [#allocation3], 1
    %123 = vsyncpa [#allocation4], 1

</llo_original>
